<compile_context>
chip_gen: v5e
topology: v5e:2x2
jax: 0.10.0
libtpu: 0.0.40
codegen_flags: <defaults>
</compile_context>

<pallas_src>
import jax
import jax.numpy as jnp
from jax.experimental import pallas as pl
from jax.experimental.pallas import tpu as pltpu


def fused_linear_kernel(x_ref, w_ref, b_ref, o_ref):
    # One batch tile: x_tile @ W_eff + b_eff.  MXU matmul with f32
    # accumulation, single VPU bias add as the epilogue.
    o_ref[...] = (
        jnp.dot(x_ref[...], w_ref[...], preferred_element_type=jnp.float32)
        + b_ref[...]
    ).astype(o_ref.dtype)


def fold_normalization(mean_x, std_x, w, b, std_y, mean_y):
    """Fold normalize/denormalize into effective weights (trace-time, outside kernel).

    ((x - mean_x)/std_x @ W + b) * std_y + mean_y  ==  x @ W_eff + b_eff
      W_eff = (W / std_x.T) * std_y
      b_eff = (b - (mean_x/std_x) @ W) * std_y + mean_y

    Exact algebraically; numerically assumes std_x is bounded away from 0.
    """
    inv_std_x = 1.0 / std_x                                    # (1, D_in)
    w_eff = (w * inv_std_x.reshape(-1, 1)) * std_y             # (D_in, D_out)
    b_eff = (b - (mean_x * inv_std_x) @ w) * std_y + mean_y    # (1, D_out)
    return w_eff, b_eff


def _round_up(x, m):
    return ((x + m - 1) // m) * m


def _pick_batch_tile(B, block_b):
    """Pick a batch tile: big (bandwidth), multiple of 8 (sublane), and small
    enough that the grid has >= 2 steps so v7x's two TensorCores both get work."""
    if B <= 8:
        return B  # single full-array block (exempt from the (8,128) rule)
    half = _round_up(pl.cdiv(B, 2), 8)          # ensures >= 2 grid steps
    return max(8, min(_round_up(block_b, 8), half))


def normalized_model_forward(x, mean_x, std_x, w, b, std_y, mean_y, *,
                             block_b=1024, compute_dtype=jnp.float32):
    B, D_in = x.shape
    D_out = w.shape[1]

    # Fold the normalization stats into W/b (fused into the surrounding jit).
    w_eff, b_eff = fold_normalization(mean_x, std_x, w, b, std_y, mean_y)

    # Optional narrow compute dtype for the two bandwidth-dominant operands.
    x_c = x.astype(compute_dtype)
    w_c = w_eff.astype(compute_dtype)
    b_c = b_eff.astype(jnp.float32)

    tb = _pick_batch_tile(B, block_b)
    grid = (pl.cdiv(B, tb),)  # partial last block: OOB stores are masked by Pallas

    in_bytes = jnp.dtype(compute_dtype).itemsize
    cost = pl.CostEstimate(
        flops=2 * B * D_in * D_out,
        transcendentals=0,
        bytes_accessed=int(
            B * D_in * in_bytes + D_in * D_out * in_bytes
            + D_out * 4 + B * D_out * 4
        ),
    )

    # Scoped-VMEM estimate: double-buffered x and out tiles + resident W/bias
    # (also double-buffered by default, negligible at D=128).  Give headroom,
    # stay comfortably inside v5e's scoped default story and v7x's 64 MiB.
    vmem_est = (2 * tb * D_in * in_bytes + 2 * tb * D_out * 4
                + 2 * D_in * D_out * in_bytes + 2 * D_out * 4)
    vmem_limit = int(min(max(32 << 20, 2 * vmem_est), 100 << 20))

    out = pl.pallas_call(
        fused_linear_kernel,
        out_shape=jax.ShapeDtypeStruct((B, D_out), jnp.float32),
        grid_spec=pltpu.PrefetchScalarGridSpec(
            num_scalar_prefetch=0,
            grid=grid,
            in_specs=[
                pl.BlockSpec((tb, D_in), lambda i: (i, 0)),      # x batch tile
                pl.BlockSpec((D_in, D_out), lambda i: (0, 0)),   # W_eff (VMEM-resident)
                pl.BlockSpec((1, D_out), lambda i: (0, 0)),      # b_eff (VMEM-resident)
            ],
            out_specs=pl.BlockSpec((tb, D_out), lambda i: (i, 0)),
        ),
        compiler_params=pltpu.CompilerParams(
            dimension_semantics=("parallel",),   # batch tiles shard across TCs
            vmem_limit_bytes=vmem_limit,
        ),
        cost_estimate=cost,
    )(x_c, w_c, b_c)

    return out


def reference_forward(x, mean_x, std_x, w, b, std_y, mean_y):
    # Pure-JAX reference mirroring the PyTorch module semantics
    # (normalize -> linear -> denormalize).
    return (((x - mean_x) / std_x) @ w + b) * std_y + mean_y


if __name__ == "__main__":
    key = jax.random.PRNGKey(0)
    k_x, k_w, k_b, k_mx, k_sx, k_my, k_sy = jax.random.split(key, 7)

    # Lane-dense feature dims (multiple of 128).  Batch chosen NOT to be a
    # tile multiple so the masked partial-last-block path is exercised, and
    # large enough that the grid has 2 steps (one per TC on v7x).
    B, D_in, D_out = 300, 128, 128

    x = jax.random.normal(k_x, (B, D_in), dtype=jnp.float32)

    # Deterministic parameters for the inner Linear model.
    w = jax.random.normal(k_w, (D_in, D_out), dtype=jnp.float32) * 0.1
    b = jax.random.normal(k_b, (1, D_out), dtype=jnp.float32) * 0.1

    # Deterministic normalization statistics (independent keys, std > 0).
    mean_x = jax.random.normal(k_mx, (1, D_in), dtype=jnp.float32) * 0.5
    std_x = jnp.abs(jax.random.normal(k_sx, (1, D_in), dtype=jnp.float32)) + 0.5
    mean_y = jax.random.normal(k_my, (1, D_out), dtype=jnp.float32) * 0.5
    std_y = jnp.abs(jax.random.normal(k_sy, (1, D_out), dtype=jnp.float32)) + 0.5

    # Jit the whole forward so the normalization fold fuses with the call and
    # incurs no separate HBM round trips / dispatch overhead.
    fwd = jax.jit(normalized_model_forward,
                  static_argnames=("block_b", "compute_dtype"))

    out = jax.block_until_ready(fwd(x, mean_x, std_x, w, b, std_y, mean_y))

    ref = reference_forward(x, mean_x, std_x, w, b, std_y, mean_y)
    assert out.shape == ref.shape, "shape mismatch vs reference"
    assert jnp.allclose(out, ref, atol=1e-4, rtol=1e-4), "mismatch vs reference"

    print("KERNEL_OK")
</pallas_src>

<mosaic_0001>
module attributes {stable_mosaic.version = 11 : i64} {
  func.func @fused_linear_kernel(%arg0: i32, %arg1: memref<152x128xf32, #tpu.memory_space<vmem>>, %arg2: memref<128x128xf32, #tpu.memory_space<vmem>>, %arg3: memref<1x128xf32, #tpu.memory_space<vmem>>, %arg4: memref<152x128xf32, #tpu.memory_space<vmem>>) attributes {dimension_semantics = [#tpu.dimension_semantics<parallel>], iteration_bounds = array<i64: 2>, scalar_prefetch = 0 : i64, scratch_operands = 0 : i64, tpu.core_type = #tpu.core_type<tc>, window_params = [{transform_indices = @transform_0, window_bounds = array<i64: 152, 128>}, {pipeline_mode = #tpu.pipeline_mode<synchronous>, transform_indices = @transform_1, window_bounds = array<i64: 128, 128>}, {pipeline_mode = #tpu.pipeline_mode<synchronous>, transform_indices = @transform_2, window_bounds = array<i64: 1, 128>}, {transform_indices = @transform_3, window_bounds = array<i64: 152, 128>}]} {
    %c0 = arith.constant 0 : index
    %c0_0 = arith.constant 0 : index
    %0 = vector.load %arg1[%c0, %c0_0] : memref<152x128xf32, #tpu.memory_space<vmem>>, vector<152x128xf32>
    %c0_1 = arith.constant 0 : index
    %c0_2 = arith.constant 0 : index
    %1 = vector.load %arg2[%c0_1, %c0_2] : memref<128x128xf32, #tpu.memory_space<vmem>>, vector<128x128xf32>
    %cst = arith.constant dense<0.000000e+00> : vector<152x128xf32>
    %2 = tpu.matmul %0, %1, %cst {dimension_numbers = #tpu.dot_dimension_numbers<[1], [0], [0], [1], [0, 0, 1, 1], [], []>} : vector<152x128xf32>, vector<128x128xf32>, vector<152x128xf32> -> vector<152x128xf32>
    %c0_3 = arith.constant 0 : index
    %c0_4 = arith.constant 0 : index
    %3 = vector.load %arg3[%c0_3, %c0_4] : memref<1x128xf32, #tpu.memory_space<vmem>>, vector<1x128xf32>
    %4 = vector.broadcast %3 : vector<1x128xf32> to vector<152x128xf32>
    %5 = arith.addf %2, %4 : vector<152x128xf32>
    %c0_5 = arith.constant 0 : index
    %c0_6 = arith.constant 0 : index
    %6 = vector.load %arg4[%c0_5, %c0_6] : memref<152x128xf32, #tpu.memory_space<vmem>>, vector<152x128xf32>
    tpu.vector_store %arg4[%c0_5, %c0_6], %5 {strides = array<i32>} : memref<152x128xf32, #tpu.memory_space<vmem>>, vector<152x128xf32>,
    return
  }
  func.func @transform_0(%arg0: i32) -> (i32, i32) {
    %c0_i32 = arith.constant 0 : i32
    %c0_i32_0 = arith.constant 0 : i32
    return %arg0, %c0_i32 : i32, i32
  }
  func.func @transform_1(%arg0: i32) -> (i32, i32) {
    %c0_i32 = arith.constant 0 : i32
    %c0_i32_0 = arith.constant 0 : i32
    %c0_i32_1 = arith.constant 0 : i32
    return %c0_i32, %c0_i32_0 : i32, i32
  }
  func.func @transform_2(%arg0: i32) -> (i32, i32) {
    %c0_i32 = arith.constant 0 : i32
    %c0_i32_0 = arith.constant 0 : i32
    %c0_i32_1 = arith.constant 0 : i32
    return %c0_i32, %c0_i32_0 : i32, i32
  }
  func.func @transform_3(%arg0: i32) -> (i32, i32) {
    %c0_i32 = arith.constant 0 : i32
    %c0_i32_0 = arith.constant 0 : i32
    return %arg0, %c0_i32 : i32, i32
  }
}

</mosaic_0001>

<llo_original>
// kernel: normalized_model_forward.1
$region0: #{normalized_model_forward.1}
  #allocation0 [shape = 'u32[]', space=smem, size = 0x4, offset = 0x4, fixed_abs, tag = 'smem constant byte address 0x4 - core index']
  #allocation1 [shape = 'u32[72,128]{1,0:T(1,128)}', space=vmem, size = 0x9000, scoped, tag = 'internal scratch']
  %s0 = inlined_call_operand.hbm [shape: f32[300,128], index: 0, kind: input, shape index: {}]
  %s1 = inlined_call_operand.vmem [shape: f32[128,128], index: 1, kind: input, shape index: {}]
  %s2 = inlined_call_operand.vmem [shape: f32[1,128], index: 2, kind: input, shape index: {}]
  %s3 = inlined_call_operand.hbm [shape: f32[300,128], index: 3, kind: output, shape index: {}]
  %s4 = sld [smem:[#allocation0]]
  $region49: #{normalized_model_forward.1} parent=0
    _
  %s6 = ssub.s32 1, %s4
  %s7 = scalar_select 0, %s6, %s4
  $region1: #{normalized_model_forward.1} parent=0
    #allocation2 [shape = 'u8[155648]{0}', space=vmem, size = 0x26000, scoped, tag = 'input window, operand 0']
    #allocation3 [shape = 's32[2]{0}', space=sflag, size = 0x8, scoped, tag = 'scoped memory for normalized_model_forward.1']
    #allocation4 [shape = 's32[2]{0}', space=sflag, size = 0x8, scoped, tag = 'scoped memory for normalized_model_forward.1']
    #allocation5 [shape = 'u8[155648]{0}', space=vmem, size = 0x26000, scoped, tag = 'output window, operand 0']
    %8 = vsyncpa [#allocation3], 0
    %s9 = scalar_lea.sflag [#allocation3], 1
    %10 = vsyncpa %s9, 0
    %11 = vsyncpa [#allocation4], 0
    %s12 = scalar_lea.sflag [#allocation4], 1
    %13 = vsyncpa %s12, 0
    loop: start=0, step=1, limit=4
    $region2: #{normalized_model_forward.1} parent=1 // loop_pre_header
      _
    $region3: #{normalized_model_forward.1} parent=1 // loop_header
      %s15 = sphi 0, %s19
      %p16 = scmp.ge.s32.totalorder %s15, 4
      %s25 = sphi 0, %s27
      %s28 = sphi 0, %s25
      %s29 = sphi 0, %s28
      %s45 = sphi 0, %s29
      %s49 = sphi 0, %s49
      %s51 = sphi 0, %s49
      %s52 = sphi 0, %s51
      %s66 = sphi 0, %s52
      %s70 = sphi 0, %s70
      %s72 = sphi 0, %s70
      %s73 = sphi 0, %s72
      %s87 = sphi 0, %s73
      %s93 = sphi 0, %s95
      %s96 = sphi 0, %s93
      %s97 = sphi 0, %s96
      %s113 = sphi 0, %s97
    $region4: #{normalized_model_forward.1} parent=1 // loop_header_branch
      %18 = sbr.rel (%p16) target = $region8
    $region5: #{normalized_model_forward.1} parent=1 // loop_body
      %s20 = ssub.s32 %s15, 1
      %s21 = ssub.s32 %s15, 2
      %s22 = sadd.s32 %s15, 1
      %s23 = ssub.s32 %s15, %s22
      %p24 = scmp.eq.s32.totalorder %s23, 0
      %s26 = sadd.s32 %s25, 1
      %s27 = scalar_select %p24, %s25, %s26
      %p30 = pneg %p24
      %p31 = scmp.eq.s32.totalorder %s15, 1
      %p32 = por %p30, %p31
      %p33 = scmp.ne.s32.totalorder %s25, %s28
      %p34 = scmp.eq.s32.totalorder %s15, 0
      %p35 = por %p33, %p34
      %p36 = scmp.ne.s32.totalorder %s25, %s28
      %p37 = scmp.eq.s32.totalorder %s20, 1
      %p38 = por %p36, %p37
      %p39 = scmp.ne.s32.totalorder %s28, %s29
      %p40 = scmp.eq.s32.totalorder %s20, 0
      %p41 = por %p39, %p40
      %p42 = scmp.ne.s32.totalorder %s28, %s29
      %p43 = scmp.eq.s32.totalorder %s21, 1
      %p44 = por %p42, %p43
      %p46 = scmp.ne.s32.totalorder %s29, %s45
      %p47 = scmp.eq.s32.totalorder %s21, 0
      %p48 = por %p46, %p47
      %s50 = sadd.s32 %s49, 1
      %p53 = scmp.eq.s32.totalorder %s15, 1
      %p54 = scmp.ne.s32.totalorder %s49, %s51
      %p55 = scmp.eq.s32.totalorder %s15, 0
      %p56 = por %p54, %p55
      %p57 = scmp.ne.s32.totalorder %s49, %s51
      %p58 = scmp.eq.s32.totalorder %s20, 1
      %p59 = por %p57, %p58
      %p60 = scmp.ne.s32.totalorder %s51, %s52
      %p61 = scmp.eq.s32.totalorder %s20, 0
      %p62 = por %p60, %p61
      %p63 = scmp.ne.s32.totalorder %s51, %s52
      %p64 = scmp.eq.s32.totalorder %s21, 1
      %p65 = por %p63, %p64
      %p67 = scmp.ne.s32.totalorder %s52, %s66
      %p68 = scmp.eq.s32.totalorder %s21, 0
      %p69 = por %p67, %p68
      %s71 = sadd.s32 %s70, 1
      %p74 = scmp.eq.s32.totalorder %s15, 1
      %p75 = scmp.ne.s32.totalorder %s70, %s72
      %p76 = scmp.eq.s32.totalorder %s15, 0
      %p77 = por %p75, %p76
      %p78 = scmp.ne.s32.totalorder %s70, %s72
      %p79 = scmp.eq.s32.totalorder %s20, 1
      %p80 = por %p78, %p79
      %p81 = scmp.ne.s32.totalorder %s72, %s73
      %p82 = scmp.eq.s32.totalorder %s20, 0
      %p83 = por %p81, %p82
      %p84 = scmp.ne.s32.totalorder %s72, %s73
      %p85 = scmp.eq.s32.totalorder %s21, 1
      %p86 = por %p84, %p85
      %p88 = scmp.ne.s32.totalorder %s73, %s87
      %p89 = scmp.eq.s32.totalorder %s21, 0
      %p90 = por %p88, %p89
      %s91 = ssub.s32 %s15, %s22
      %p92 = scmp.eq.s32.totalorder %s91, 0
      %s94 = sadd.s32 %s93, 1
      %s95 = scalar_select %p92, %s93, %s94
      %p98 = pneg %p92
      %p99 = scmp.eq.s32.totalorder %s15, 1
      %p100 = por %p98, %p99
      %p101 = scmp.ne.s32.totalorder %s93, %s96
      %p102 = scmp.eq.s32.totalorder %s15, 0
      %p103 = por %p101, %p102
      %p104 = scmp.ne.s32.totalorder %s93, %s96
      %p105 = scmp.eq.s32.totalorder %s20, 1
      %p106 = por %p104, %p105
      %p107 = scmp.ne.s32.totalorder %s96, %s97
      %p108 = scmp.eq.s32.totalorder %s20, 0
      %p109 = por %p107, %p108
      %p110 = scmp.ne.s32.totalorder %s96, %s97
      %p111 = scmp.eq.s32.totalorder %s21, 1
      %p112 = por %p110, %p111
      %p114 = scmp.ne.s32.totalorder %s97, %s113
      %p115 = scmp.eq.s32.totalorder %s21, 0
      %p116 = por %p114, %p115
      %p117 = scmp.le.s32.totalorder 1, %s15
      %p118 = scmp.lt.s32.totalorder %s15, 3
      %p119 = pnand %p117, %p118
      %p120 = pneg %p119
      // Predicated region
      $region9: #{normalized_model_forward.1} parent=5 // pred_check
        _
      $region10: #{normalized_model_forward.1} parent=5 // pred_check_branch
        %122 = sbr.rel (%p119) target = $region12
      $region11: #{normalized_model_forward.1} parent=5 // pred_region
        %s123 = ssub.s32 %s15, 1
        // Predicated region
        $region13: #{normalized_model_forward.1} parent=11 // pred_check
          %p124 = pneg %p62
        $region14: #{normalized_model_forward.1} parent=11 // pred_check_branch
          %126 = sbr.rel (%p124) target = $region16
        $region15: #{normalized_model_forward.1} parent=11 // pred_region
          _
        $region16: #{normalized_model_forward.1} parent=11 // pred_fallthru
          _
        // Predicated region
        $region17: #{normalized_model_forward.1} parent=11 // pred_check
          %p127 = pneg %p83
        $region18: #{normalized_model_forward.1} parent=11 // pred_check_branch
          %129 = sbr.rel (%p127) target = $region20
        $region19: #{normalized_model_forward.1} parent=11 // pred_region
          _
        $region20: #{normalized_model_forward.1} parent=11 // pred_fallthru
          _
      $region12: #{normalized_model_forward.1} parent=5 // pred_fallthru
        _
      %p130 = scmp.lt.s32.totalorder %s15, 2
      // Predicated region
      $region21: #{normalized_model_forward.1} parent=5 // pred_check
        %p131 = pneg %p130
      $region22: #{normalized_model_forward.1} parent=5 // pred_check_branch
        %133 = sbr.rel (%p131) target = $region24
      $region23: #{normalized_model_forward.1} parent=5 // pred_region
        // Predicated region
        $region25: #{normalized_model_forward.1} parent=23 // pred_check
          %p134 = pneg %p35
        $region26: #{normalized_model_forward.1} parent=23 // pred_check_branch
          %136 = sbr.rel (%p134) target = $region28
        $region27: #{normalized_model_forward.1} parent=23 // pred_region
          %s137 = sand.u32 %s25, 1
          %s138 = scalar_lea.sflag [#allocation3], %s137
          %s139 = sand.u32 %s25, 1
          %s140 = smul.addr %s139, 152
          %s141 = scalar_lea.vmem [#allocation2], %s140
          %s142 = smul.u32 19, %s15
          %144 = vsyncadd %s138, 0
          %s145 = smul.addr %s142, 8
          %s146 = scalar_lea.hbm %s0, %s145
          %s147 = sshll.u32 %s146, 4
          %s148 = int_to_ptr.hbm [resolvable:$true] %s147
          %s149 = sshll.u32 %s141, 4
          %s150 = int_to_ptr.vmem [resolvable:$true] %s149
          %155 = dma.hbm_to_vmem [thread:$0]  %s148, 2432, %s150, %s138, 128, 128, 8
        $region28: #{normalized_model_forward.1} parent=23 // pred_fallthru
          _
      $region24: #{normalized_model_forward.1} parent=5 // pred_fallthru
        _
      %p156 = scmp.le.s32.totalorder 1, %s15
      %p157 = scmp.lt.s32.totalorder %s15, 3
      %p158 = pnand %p156, %p157
      %p159 = pneg %p158
      // Predicated region
      $region29: #{normalized_model_forward.1} parent=5 // pred_check
        _
      $region30: #{normalized_model_forward.1} parent=5 // pred_check_branch
        %161 = sbr.rel (%p158) target = $region32
      $region31: #{normalized_model_forward.1} parent=5 // pred_region
        %s162 = ssub.s32 %s15, 1
        %s163 = sand.u32 %s28, 1
        %s164 = scalar_lea.sflag [#allocation3], %s163
        %s165 = sand.u32 %s28, 1
        %s166 = smul.addr %s165, 152
        %s167 = scalar_lea.vmem [#allocation2], %s166
        // Predicated region
        $region33: #{normalized_model_forward.1} parent=31 // pred_check
          %p168 = pneg %p41
        $region34: #{normalized_model_forward.1} parent=31 // pred_check_branch
          %170 = sbr.rel (%p168) target = $region36
        $region35: #{normalized_model_forward.1} parent=31 // pred_region
          %172 = dma.done %s164, 2432
        $region36: #{normalized_model_forward.1} parent=31 // pred_fallthru
          _
        %s173 = sand.u32 %s28, 1
        %s174 = scalar_lea.sflag [#allocation3], %s173
        %s175 = sand.u32 %s28, 1
        %s176 = smul.addr %s175, 152
        %s177 = scalar_lea.vmem [#allocation2], %s176
        %p178 = pneg %p41
        %p179 = pneg %p38
        %p180 = pneg %p62
        %p181 = pneg %p59
        %p182 = pneg %p83
        %p183 = pneg %p80
        %p184 = pneg %p109
        %p185 = pneg %p106
        %s186 = sand.u32 %s96, 1
        %s187 = scalar_lea.sflag [#allocation4], %s186
        %s188 = sand.u32 %s96, 1
        %s189 = smul.addr %s188, 152
        %s190 = scalar_lea.vmem [#allocation5], %s189
        %s191 = smul.u32 19, %s20
        %s192 = smul.u32 19, %s20
        %v193 = vld [vmem:[%s167] sm:$0xff]
        %v194 = vld [vmem:[%s167 + $0x8] sm:$0xff]
        %v195 = vld [vmem:[%s167 + $0x10] sm:$0xff]
        %v196 = vld [vmem:[%s167 + $0x18] sm:$0xff]
        %v197 = vld [vmem:[%s167 + $0x20] sm:$0xff]
        %v198 = vld [vmem:[%s167 + $0x28] sm:$0xff]
        %v199 = vld [vmem:[%s167 + $0x30] sm:$0xff]
        %v200 = vld [vmem:[%s167 + $0x38] sm:$0xff]
        %v201 = vld [vmem:[%s167 + $0x40] sm:$0xff]
        %v202 = vld [vmem:[%s167 + $0x48] sm:$0xff]
        %v203 = vld [vmem:[%s167 + $0x50] sm:$0xff]
        %v204 = vld [vmem:[%s167 + $0x58] sm:$0xff]
        %v205 = vld [vmem:[%s167 + $0x60] sm:$0xff]
        %v206 = vld [vmem:[%s167 + $0x68] sm:$0xff]
        %v207 = vld [vmem:[%s167 + $0x70] sm:$0xff]
        %v208 = vld [vmem:[%s167 + $0x78] sm:$0xff]
        %v209 = vld [vmem:[%s167 + $0x80] sm:$0xff]
        %v210 = vld [vmem:[%s167 + $0x88] sm:$0xff]
        %v211 = vld [vmem:[%s167 + $0x90] sm:$0xff]
        %v212 = vld [vmem:[%s1] sm:$0xff]
        %v213 = vld [vmem:[%s1 + $0x8] sm:$0xff]
        %v214 = vld [vmem:[%s1 + $0x10] sm:$0xff]
        %v215 = vld [vmem:[%s1 + $0x18] sm:$0xff]
        %v216 = vld [vmem:[%s1 + $0x20] sm:$0xff]
        %v217 = vld [vmem:[%s1 + $0x28] sm:$0xff]
        %v218 = vld [vmem:[%s1 + $0x30] sm:$0xff]
        %v219 = vld [vmem:[%s1 + $0x38] sm:$0xff]
        %v220 = vld [vmem:[%s1 + $0x40] sm:$0xff]
        %v221 = vld [vmem:[%s1 + $0x48] sm:$0xff]
        %v222 = vld [vmem:[%s1 + $0x50] sm:$0xff]
        %v223 = vld [vmem:[%s1 + $0x58] sm:$0xff]
        %v224 = vld [vmem:[%s1 + $0x60] sm:$0xff]
        %v225 = vld [vmem:[%s1 + $0x68] sm:$0xff]
        %v226 = vld [vmem:[%s1 + $0x70] sm:$0xff]
        %v227 = vld [vmem:[%s1 + $0x78] sm:$0xff]
        %v228 = vld [vmem:[%s2] sm:$0x1]
        %v230 = vperm.slane %v228, 0
        %232 = vmatpush.msra.mxu0 %v227
        %233 = vmatpush.msra.mxu0 %v226
        %234 = vmatpush.msra.mxu0 %v225
        %235 = vmatpush.msra.mxu0 %v224
        %236 = vmatpush.msra.mxu0 %v223
        %237 = vmatpush.msra.mxu0 %v222
        %238 = vmatpush.msra.mxu0 %v221
        %239 = vmatpush.msra.mxu0 %v220
        %240 = vmatpush.msra.mxu0 %v219
        %241 = vmatpush.msra.mxu0 %v218
        %242 = vmatpush.msra.mxu0 %v217
        %243 = vmatpush.msra.mxu0 %v216
        %244 = vmatpush.msra.mxu0 %v215
        %245 = vmatpush.msra.mxu0 %v214
        %246 = vmatpush.msra.mxu0 %v213
        %247 = vmatpush.msra.mxu0 %v212
        %248 = vmatmul.f32.gmra.mxu0 %v193
        %v249 = vpop.f32.mrf.mxu0
        %v250 = vadd.f32 %v230, %v249
        %251 = vmatmul.f32.gmra.mxu0 %v194
        %v252 = vpop.f32.mrf.mxu0
        %v253 = vadd.f32 %v230, %v252
        %254 = vmatmul.f32.gmra.mxu0 %v195
        %v255 = vpop.f32.mrf.mxu0
        %v256 = vadd.f32 %v230, %v255
        %257 = vmatmul.f32.gmra.mxu0 %v196
        %v258 = vpop.f32.mrf.mxu0
        %v259 = vadd.f32 %v230, %v258
        %260 = vmatmul.f32.gmra.mxu0 %v197
        %v261 = vpop.f32.mrf.mxu0
        %v262 = vadd.f32 %v230, %v261
        %263 = vmatmul.f32.gmra.mxu0 %v198
        %v264 = vpop.f32.mrf.mxu0
        %v265 = vadd.f32 %v230, %v264
        %266 = vmatmul.f32.gmra.mxu0 %v199
        %v267 = vpop.f32.mrf.mxu0
        %v268 = vadd.f32 %v230, %v267
        %269 = vmatmul.f32.gmra.mxu0 %v200
        %v270 = vpop.f32.mrf.mxu0
        %v271 = vadd.f32 %v230, %v270
        %272 = vmatmul.f32.gmra.mxu0 %v201
        %v273 = vpop.f32.mrf.mxu0
        %v274 = vadd.f32 %v230, %v273
        %275 = vmatmul.f32.gmra.mxu0 %v202
        %v276 = vpop.f32.mrf.mxu0
        %v277 = vadd.f32 %v230, %v276
        %278 = vmatmul.f32.gmra.mxu0 %v203
        %v279 = vpop.f32.mrf.mxu0
        %v280 = vadd.f32 %v230, %v279
        %281 = vmatmul.f32.gmra.mxu0 %v204
        %v282 = vpop.f32.mrf.mxu0
        %v283 = vadd.f32 %v230, %v282
        %284 = vmatmul.f32.gmra.mxu0 %v205
        %v285 = vpop.f32.mrf.mxu0
        %v286 = vadd.f32 %v230, %v285
        %287 = vmatmul.f32.gmra.mxu0 %v206
        %v288 = vpop.f32.mrf.mxu0
        %v289 = vadd.f32 %v230, %v288
        %290 = vmatmul.f32.gmra.mxu0 %v207
        %v291 = vpop.f32.mrf.mxu0
        %v292 = vadd.f32 %v230, %v291
        %293 = vmatmul.f32.gmra.mxu0 %v208
        %v294 = vpop.f32.mrf.mxu0
        %v295 = vadd.f32 %v230, %v294
        %296 = vmatmul.f32.gmra.mxu0 %v209
        %v297 = vpop.f32.mrf.mxu0
        %v298 = vadd.f32 %v230, %v297
        %299 = vmatmul.f32.gmra.mxu0 %v210
        %v300 = vpop.f32.mrf.mxu0
        %v301 = vadd.f32 %v230, %v300
        %302 = vmatmul.f32.gmra.mxu0 %v211
        %v303 = vpop.f32.mrf.mxu0
        %v304 = vadd.f32 %v230, %v303
        %305 = vdwg.mxu0
        %306 = vst [vmem:[%s190] sm:$0xff] %v250
        %307 = vst [vmem:[%s190 + $0x8] sm:$0xff] %v253
        %308 = vst [vmem:[%s190 + $0x10] sm:$0xff] %v256
        %309 = vst [vmem:[%s190 + $0x18] sm:$0xff] %v259
        %310 = vst [vmem:[%s190 + $0x20] sm:$0xff] %v262
        %311 = vst [vmem:[%s190 + $0x28] sm:$0xff] %v265
        %312 = vst [vmem:[%s190 + $0x30] sm:$0xff] %v268
        %313 = vst [vmem:[%s190 + $0x38] sm:$0xff] %v271
        %314 = vst [vmem:[%s190 + $0x40] sm:$0xff] %v274
        %315 = vst [vmem:[%s190 + $0x48] sm:$0xff] %v277
        %316 = vst [vmem:[%s190 + $0x50] sm:$0xff] %v280
        %317 = vst [vmem:[%s190 + $0x58] sm:$0xff] %v283
        %318 = vst [vmem:[%s190 + $0x60] sm:$0xff] %v286
        %319 = vst [vmem:[%s190 + $0x68] sm:$0xff] %v289
        %320 = vst [vmem:[%s190 + $0x70] sm:$0xff] %v292
        %321 = vst [vmem:[%s190 + $0x78] sm:$0xff] %v295
        %322 = vst [vmem:[%s190 + $0x80] sm:$0xff] %v298
        %323 = vst [vmem:[%s190 + $0x88] sm:$0xff] %v301
        %324 = vst [vmem:[%s190 + $0x90] sm:$0xff] %v304
        %s325 = sand.u32 %s96, 1
        %s326 = scalar_lea.sflag [#allocation4], %s325
        %s327 = sand.u32 %s96, 1
        %s328 = smul.addr %s327, 152
        %s329 = scalar_lea.vmem [#allocation5], %s328
        // Predicated region
        $region37: #{normalized_model_forward.1} parent=31 // pred_check
          %p330 = pneg %p106
        $region38: #{normalized_model_forward.1} parent=31 // pred_check_branch
          %332 = sbr.rel (%p330) target = $region40
        $region39: #{normalized_model_forward.1} parent=31 // pred_region
          %s333 = smul.u32 19, %s20
          %335 = vsyncadd %s326, 0
          %s336 = smul.addr %s333, 8
          %s337 = scalar_lea.hbm %s3, %s336
          %s338 = sshll.u32 %s329, 4
          %s339 = int_to_ptr.vmem [resolvable:$true] %s338
          %s340 = sshll.u32 %s337, 4
          %s341 = int_to_ptr.hbm [resolvable:$true] %s340
          %346 = dma.vmem_to_hbm [thread:$0]  %s339, 2432, %s341, %s326, 128, 128, 8
        $region40: #{normalized_model_forward.1} parent=31 // pred_fallthru
          _
      $region32: #{normalized_model_forward.1} parent=5 // pred_fallthru
        _
      %p347 = scmp.le.s32.totalorder 2, %s15
      // Predicated region
      $region41: #{normalized_model_forward.1} parent=5 // pred_check
        %p348 = pneg %p347
      $region42: #{normalized_model_forward.1} parent=5 // pred_check_branch
        %350 = sbr.rel (%p348) target = $region44
      $region43: #{normalized_model_forward.1} parent=5 // pred_region
        %s351 = ssub.s32 %s15, 2
        // Predicated region
        $region45: #{normalized_model_forward.1} parent=43 // pred_check
          %p352 = pneg %p112
        $region46: #{normalized_model_forward.1} parent=43 // pred_check_branch
          %354 = sbr.rel (%p352) target = $region48
        $region47: #{normalized_model_forward.1} parent=43 // pred_region
          %s355 = sand.u32 %s97, 1
          %s356 = scalar_lea.sflag [#allocation4], %s355
          %s357 = sand.u32 %s97, 1
          %s358 = smul.addr %s357, 152
          %s359 = scalar_lea.vmem [#allocation5], %s358
          %361 = dma.done %s356, 2432
        $region48: #{normalized_model_forward.1} parent=43 // pred_fallthru
          _
      $region44: #{normalized_model_forward.1} parent=5 // pred_fallthru
        _
    $region6: #{normalized_model_forward.1} parent=1 // loop_footer
      %s19 = sadd.s32 1, %s15
    $region7: #{normalized_model_forward.1} parent=1 // loop_footer_branch
      %14 = sbr.rel target = $region3
    $region8: #{normalized_model_forward.1} parent=1 // loop_exit
      _
    %362 = vsyncpa [#allocation3], 1
    %s363 = scalar_lea.sflag [#allocation3], 1
    %364 = vsyncpa %s363, 1
    %365 = vsyncpa [#allocation4], 1
    %s366 = scalar_lea.sflag [#allocation4], 1
    %367 = vsyncpa %s366, 1

</llo_original>
